<compile_context>
chip_gen: v7x
topology: tpu7x:2x2x1
jax: 0.10.0
libtpu: 0.0.40
codegen_flags: <defaults>
</compile_context>

<pallas_src>
import math
from functools import partial

import jax
import jax.numpy as jnp
from jax import lax
from jax.experimental import pallas as pl
from jax.experimental.pallas import tpu as pltpu


# ----------------------------------------------------------------------------
# Kernel A: bidirectional LSTM normalizer over the pooled input.
# ----------------------------------------------------------------------------
def _normalizer_kernel(inp_ref, wih_f_ref, whh_f_ref, b_f_ref,
                       wih_r_ref, whh_r_ref, b_r_ref,
                       norm_ref, xpf_ref, xpr_ref, hb_ref):
    B, TS, F = inp_ref.shape
    cd = wih_f_ref.dtype                        # MXU compute dtype (bf16 or f32)

    # Hoisted input projections: one (B*TS, F) @ (F, 4F) matmul per direction,
    # f32 accumulation, bias folded in.  Stored to VMEM scratch so the
    # recurrent loop only does one small h @ W_hh dot per step.
    inp2 = inp_ref[...].reshape(B * TS, F).astype(cd)
    xpf = jnp.dot(inp2, wih_f_ref[...], preferred_element_type=jnp.float32)
    xpr = jnp.dot(inp2, wih_r_ref[...], preferred_element_type=jnp.float32)
    xpf_ref[...] = (xpf + b_f_ref[...]).reshape(B, TS, 4 * F)
    xpr_ref[...] = (xpr + b_r_ref[...]).reshape(B, TS, 4 * F)

    whh_f = whh_f_ref[...]
    whh_r = whh_r_ref[...]

    def lstm_cell(gates, c):
        # PyTorch gate order: i, f, g, o.
        i = jax.nn.sigmoid(gates[:, 0 * F:1 * F])
        f = jax.nn.sigmoid(gates[:, 1 * F:2 * F])
        g = jnp.tanh(gates[:, 2 * F:3 * F])
        o = jax.nn.sigmoid(gates[:, 3 * F:4 * F])
        c_new = f * c + i * g
        h_new = o * jnp.tanh(c_new)
        return h_new, c_new

    h0 = jnp.zeros((TS, F), jnp.float32)
    c0 = jnp.zeros((TS, F), jnp.float32)
    unroll = True if B <= 8 else 4              # bounded unroll, not Python unroll

    # Forward direction ("time" axis is B because of the seq-first LSTM quirk).
    def fwd_body(t, carry):
        h, c = carry
        gates = xpf_ref[t] + jnp.dot(h.astype(cd), whh_f,
                                     preferred_element_type=jnp.float32)
        h, c = lstm_cell(gates, c)
        norm_ref[t] = h
        return h, c

    lax.fori_loop(0, B, fwd_body, (h0, c0), unroll=unroll)

    # Backward direction -> scratch; no per-step read-modify-write of the output.
    def bwd_body(k, carry):
        h, c = carry
        t = B - 1 - k
        gates = xpr_ref[t] + jnp.dot(h.astype(cd), whh_r,
                                     preferred_element_type=jnp.float32)
        h, c = lstm_cell(gates, c)
        hb_ref[t] = h
        return h, c

    lax.fori_loop(0, B, bwd_body, (h0, c0), unroll=unroll)

    # Single dense fwd/bwd average.
    norm_ref[...] = (norm_ref[...] + hb_ref[...]) * 0.5


# ----------------------------------------------------------------------------
# Kernel B: lane-dense FiLM broadcast-multiply, pipelined over (B, S) tiles.
# ----------------------------------------------------------------------------
def _film_kernel(norm_ref, x_ref, out_ref):
    nb = x_ref.shape[-1] // norm_ref.shape[-1]
    norm = norm_ref[...]                                 # (1, ts, F)
    if nb > 1:
        # out[..., k] needs norm[..., k % F]: tile the *small* norm block along
        # lanes instead of relayout-ing the big x block.
        norm = jnp.concatenate([norm] * nb, axis=-1)     # (1, ts, nb*F)
    out_ref[...] = (x_ref[...] * norm).astype(out_ref.dtype)


def _pick_s_tile(s, row_bytes, budget_bytes):
    """Largest S-tile that (a) divides S, (b) satisfies the Mosaic block rule
    (second-to-last block dim is a multiple of 8 or the full axis) and
    (c) keeps the per-block VMEM footprint under budget (sized so that
    double-buffered blocks stay well inside the 32 MiB default scoped VMEM,
    i.e. also safe on v7x's 64 MiB physical VMEM)."""
    if s * row_bytes <= budget_bytes or s % 8 != 0:
        return s                                 # full axis (always a legal block)
    best = 8
    for c in range(8, s, 8):
        if s % c == 0 and c * row_bytes <= budget_bytes:
            best = c
    return best


@partial(jax.jit, static_argnames=("n_block", "compute_dtype"))
def tfilm_forward(x, params, *, n_block, compute_dtype=jnp.bfloat16):
    B, F, T = x.shape
    assert T % n_block == 0, "T must be divisible by n_block (as in the torch module)"
    S = T // n_block
    nbF = n_block * F
    G = 4 * F

    # --- max_pool1d(kernel_size=n_block) + transpose(2,1): tiny reduce/layout
    #     glue left to XLA (per review), so no duplicated full-size x enters VMEM.
    inp = jnp.transpose(jnp.max(x.reshape(B, F, S, n_block), axis=-1), (0, 2, 1))

    def prep(wih, whh, bih, bhh):
        # Fuse the 4 gates: (4F, F) -> (F, 4F); combined bias (1, 4F) in f32.
        return (wih.T.astype(compute_dtype),
                whh.T.astype(compute_dtype),
                (bih + bhh).reshape(1, G).astype(jnp.float32))

    wih_f, whh_f, b_f = prep(*params["fwd"])
    wih_r, whh_r, b_r = prep(*params["rev"])

    # ---- Kernel A: normalizer (bi-LSTM over (seq=B, batch=S, F)), tiled on S ----
    ts_n = _pick_s_tile(S, row_bytes=4 * B * 11 * F, budget_bytes=4 << 20)
    norm = pl.pallas_call(
        _normalizer_kernel,
        out_shape=jax.ShapeDtypeStruct((B, S, F), jnp.float32),
        grid=(S // ts_n,),
        in_specs=[
            pl.BlockSpec((B, ts_n, F), lambda s: (0, s, 0)),   # pooled input
            pl.BlockSpec((F, G), lambda s: (0, 0)),            # W_ih fwd (fused)
            pl.BlockSpec((F, G), lambda s: (0, 0)),            # W_hh fwd (fused)
            pl.BlockSpec((1, G), lambda s: (0, 0)),            # bias fwd
            pl.BlockSpec((F, G), lambda s: (0, 0)),            # W_ih rev
            pl.BlockSpec((F, G), lambda s: (0, 0)),            # W_hh rev
            pl.BlockSpec((1, G), lambda s: (0, 0)),            # bias rev
        ],
        out_specs=pl.BlockSpec((B, ts_n, F), lambda s: (0, s, 0)),
        scratch_shapes=[
            pltpu.VMEM((B, ts_n, G), jnp.float32),   # hoisted fwd input projection
            pltpu.VMEM((B, ts_n, G), jnp.float32),   # hoisted bwd input projection
            pltpu.VMEM((B, ts_n, F), jnp.float32),   # backward hidden states
        ],
        compiler_params=pltpu.CompilerParams(dimension_semantics=("parallel",)),
    )(inp, wih_f, whh_f, b_f, wih_r, whh_r, b_r)

    # ---- Kernel B: FiLM multiply on a lane-dense (B, S, n_block*F) layout ----
    # (B, F, T) -> (B, S, n_block*F) is exactly the module's raw-reshape quirk.
    x2 = x.reshape(B, S, nbF)
    ts_f = _pick_s_tile(S, row_bytes=4 * nbF, budget_bytes=2 << 20)
    y2 = pl.pallas_call(
        _film_kernel,
        out_shape=jax.ShapeDtypeStruct((B, S, nbF), x.dtype),
        grid=(B, S // ts_f),
        in_specs=[
            pl.BlockSpec((1, ts_f, F), lambda b, s: (b, s, 0)),     # norm
            pl.BlockSpec((1, ts_f, nbF), lambda b, s: (b, s, 0)),   # x (raw reshape)
        ],
        out_specs=pl.BlockSpec((1, ts_f, nbF), lambda b, s: (b, s, 0)),
        input_output_aliases={1: 0},   # write the FiLM result over x's buffer
        compiler_params=pltpu.CompilerParams(
            dimension_semantics=("parallel", "parallel")),
    )(norm, x2)

    return y2.reshape(B, F, T)


# ----------------------------------------------------------------------------
# Pure-JAX reference mirroring the PyTorch module (correctness check).
# ----------------------------------------------------------------------------
def tfilm_ref(x, params, n_block):
    B, F, T = x.shape
    S = T // n_block
    pooled = jnp.max(x.reshape(B, F, S, n_block), axis=-1)   # max_pool1d
    inp = jnp.transpose(pooled, (0, 2, 1))                   # (B,S,F): seq=B, batch=S

    def run_dir(wih, whh, bih, bhh, reverse):
        h = jnp.zeros((S, F), jnp.float32)
        c = jnp.zeros((S, F), jnp.float32)
        hs = [None] * B
        order = range(B - 1, -1, -1) if reverse else range(B)
        for t in order:
            g = inp[t] @ wih.T + bih + h @ whh.T + bhh
            i = jax.nn.sigmoid(g[:, :F])
            f = jax.nn.sigmoid(g[:, F:2 * F])
            gg = jnp.tanh(g[:, 2 * F:3 * F])
            o = jax.nn.sigmoid(g[:, 3 * F:])
            c = f * c + i * gg
            h = o * jnp.tanh(c)
            hs[t] = h
        return jnp.stack(hs)                                 # (B, S, F)

    norm = (run_dir(*params["fwd"], False) + run_dir(*params["rev"], True)) / 2
    return (x.reshape(B, S, n_block, F) * norm[:, :, None, :]).reshape(B, F, T)


if __name__ == "__main__":
    B, FILTERS, T, N_BLOCK = 2, 8, 16, 4

    key = jax.random.PRNGKey(0)
    keys = jax.random.split(key, 9)
    x = jax.random.normal(keys[0], (B, FILTERS, T), jnp.float32)

    # PyTorch-style LSTM init U(-1/sqrt(H), 1/sqrt(H)).
    bound = 1.0 / math.sqrt(FILTERS)

    def u(kk, shape):
        return jax.random.uniform(kk, shape, jnp.float32, -bound, bound)

    params = {
        "fwd": (u(keys[1], (4 * FILTERS, FILTERS)),   # weight_ih_l0
                u(keys[2], (4 * FILTERS, FILTERS)),   # weight_hh_l0
                u(keys[3], (4 * FILTERS,)),           # bias_ih_l0
                u(keys[4], (4 * FILTERS,))),          # bias_hh_l0
        "rev": (u(keys[5], (4 * FILTERS, FILTERS)),   # weight_ih_l0_reverse
                u(keys[6], (4 * FILTERS, FILTERS)),   # weight_hh_l0_reverse
                u(keys[7], (4 * FILTERS,)),           # bias_ih_l0_reverse
                u(keys[8], (4 * FILTERS,))),          # bias_hh_l0_reverse
    }

    y_ref = tfilm_ref(x, params, N_BLOCK)

    # f32 MXU path: tight structural check against the pure-JAX reference.
    y32 = tfilm_forward(x, params, n_block=N_BLOCK, compute_dtype=jnp.float32)
    jax.block_until_ready(y32)
    assert y32.shape == (B, FILTERS, T)
    assert jnp.allclose(y32, y_ref, atol=1e-4, rtol=1e-4), "f32 kernel mismatch vs reference"

    # Default bf16-MXU path (f32 state/accumulation): aggregate relative-error check.
    y16 = tfilm_forward(x, params, n_block=N_BLOCK)
    jax.block_until_ready(y16)
    assert y16.shape == (B, FILTERS, T)
    rel_err = jnp.linalg.norm(y16 - y_ref) / (jnp.linalg.norm(y_ref) + 1e-12)
    assert rel_err < 3e-2, f"bf16 kernel relative error too large: {rel_err}"

    print("KERNEL_OK")
</pallas_src>

<mosaic_0001>
module attributes {stable_mosaic.version = 11 : i64} {
  func.func @_normalizer_kernel(%arg0: i32, %arg1: memref<2x4x8xf32, #tpu.memory_space<vmem>>, %arg2: memref<8x32xf32, #tpu.memory_space<vmem>>, %arg3: memref<8x32xf32, #tpu.memory_space<vmem>>, %arg4: memref<1x32xf32, #tpu.memory_space<vmem>>, %arg5: memref<8x32xf32, #tpu.memory_space<vmem>>, %arg6: memref<8x32xf32, #tpu.memory_space<vmem>>, %arg7: memref<1x32xf32, #tpu.memory_space<vmem>>, %arg8: memref<2x4x8xf32, #tpu.memory_space<vmem>>, %arg9: memref<2x4x32xf32, #tpu.memory_space<vmem>>, %arg10: memref<2x4x32xf32, #tpu.memory_space<vmem>>, %arg11: memref<2x4x8xf32, #tpu.memory_space<vmem>>) attributes {dimension_semantics = [#tpu.dimension_semantics<parallel>], iteration_bounds = array<i64: 1>, scalar_prefetch = 0 : i64, scratch_operands = 3 : i64, tpu.core_type = #tpu.core_type<tc>, window_params = [{transform_indices = @transform_0, window_bounds = array<i64: 2, 4, 8>}, {pipeline_mode = #tpu.pipeline_mode<synchronous>, transform_indices = @transform_1, window_bounds = array<i64: 8, 32>}, {pipeline_mode = #tpu.pipeline_mode<synchronous>, transform_indices = @transform_2, window_bounds = array<i64: 8, 32>}, {pipeline_mode = #tpu.pipeline_mode<synchronous>, transform_indices = @transform_3, window_bounds = array<i64: 1, 32>}, {pipeline_mode = #tpu.pipeline_mode<synchronous>, transform_indices = @transform_4, window_bounds = array<i64: 8, 32>}, {pipeline_mode = #tpu.pipeline_mode<synchronous>, transform_indices = @transform_5, window_bounds = array<i64: 8, 32>}, {pipeline_mode = #tpu.pipeline_mode<synchronous>, transform_indices = @transform_6, window_bounds = array<i64: 1, 32>}, {transform_indices = @transform_7, window_bounds = array<i64: 2, 4, 8>}]} {
    %c0 = arith.constant 0 : index
    %c0_0 = arith.constant 0 : index
    %c0_1 = arith.constant 0 : index
    %0 = vector.load %arg1[%c0, %c0_0, %c0_1] : memref<2x4x8xf32, #tpu.memory_space<vmem>>, vector<2x4x8xf32>
    %1 = vector.shape_cast %0 : vector<2x4x8xf32> to vector<8x8xf32>
    %c0_2 = arith.constant 0 : index
    %c0_3 = arith.constant 0 : index
    %2 = vector.load %arg2[%c0_2, %c0_3] : memref<8x32xf32, #tpu.memory_space<vmem>>, vector<8x32xf32>
    %cst = arith.constant dense<0.000000e+00> : vector<8x32xf32>
    %3 = tpu.matmul %1, %2, %cst {dimension_numbers = #tpu.dot_dimension_numbers<[1], [0], [0], [1], [0, 0, 1, 1], [], []>} : vector<8x8xf32>, vector<8x32xf32>, vector<8x32xf32> -> vector<8x32xf32>
    %c0_4 = arith.constant 0 : index
    %c0_5 = arith.constant 0 : index
    %4 = vector.load %arg5[%c0_4, %c0_5] : memref<8x32xf32, #tpu.memory_space<vmem>>, vector<8x32xf32>
    %cst_6 = arith.constant dense<0.000000e+00> : vector<8x32xf32>
    %5 = tpu.matmul %1, %4, %cst_6 {dimension_numbers = #tpu.dot_dimension_numbers<[1], [0], [0], [1], [0, 0, 1, 1], [], []>} : vector<8x8xf32>, vector<8x32xf32>, vector<8x32xf32> -> vector<8x32xf32>
    %c0_7 = arith.constant 0 : index
    %c0_8 = arith.constant 0 : index
    %6 = vector.load %arg4[%c0_7, %c0_8] : memref<1x32xf32, #tpu.memory_space<vmem>>, vector<1x32xf32>
    %7 = vector.broadcast %6 : vector<1x32xf32> to vector<8x32xf32>
    %8 = arith.addf %3, %7 : vector<8x32xf32>
    %9 = vector.shape_cast %8 : vector<8x32xf32> to vector<2x4x32xf32>
    %c0_9 = arith.constant 0 : index
    %c0_10 = arith.constant 0 : index
    %c0_11 = arith.constant 0 : index
    %10 = vector.load %arg9[%c0_9, %c0_10, %c0_11] : memref<2x4x32xf32, #tpu.memory_space<vmem>>, vector<2x4x32xf32>
    tpu.vector_store %arg9[%c0_9, %c0_10, %c0_11], %9 {strides = array<i32>} : memref<2x4x32xf32, #tpu.memory_space<vmem>>, vector<2x4x32xf32>,
    %c0_12 = arith.constant 0 : index
    %c0_13 = arith.constant 0 : index
    %11 = vector.load %arg7[%c0_12, %c0_13] : memref<1x32xf32, #tpu.memory_space<vmem>>, vector<1x32xf32>
    %12 = vector.broadcast %11 : vector<1x32xf32> to vector<8x32xf32>
    %13 = arith.addf %5, %12 : vector<8x32xf32>
    %14 = vector.shape_cast %13 : vector<8x32xf32> to vector<2x4x32xf32>
    %c0_14 = arith.constant 0 : index
    %c0_15 = arith.constant 0 : index
    %c0_16 = arith.constant 0 : index
    %15 = vector.load %arg10[%c0_14, %c0_15, %c0_16] : memref<2x4x32xf32, #tpu.memory_space<vmem>>, vector<2x4x32xf32>
    tpu.vector_store %arg10[%c0_14, %c0_15, %c0_16], %14 {strides = array<i32>} : memref<2x4x32xf32, #tpu.memory_space<vmem>>, vector<2x4x32xf32>,
    %c0_17 = arith.constant 0 : index
    %c0_18 = arith.constant 0 : index
    %16 = vector.load %arg3[%c0_17, %c0_18] : memref<8x32xf32, #tpu.memory_space<vmem>>, vector<8x32xf32>
    %c0_19 = arith.constant 0 : index
    %c0_20 = arith.constant 0 : index
    %17 = vector.load %arg6[%c0_19, %c0_20] : memref<8x32xf32, #tpu.memory_space<vmem>>, vector<8x32xf32>
    %cst_21 = arith.constant 0.000000e+00 : f32
    %18 = vector.broadcast %cst_21 : f32 to vector<4x8xf32>
    %cst_22 = arith.constant 0.000000e+00 : f32
    %19 = vector.broadcast %cst_22 : f32 to vector<4x8xf32>
    %c0_i32 = arith.constant 0 : i32
    %20 = arith.index_cast %c0_i32 : i32 to index
    %c0_23 = arith.constant 0 : index
    %c0_24 = arith.constant 0 : index
    %21 = vector.load %arg9[%20, %c0_23, %c0_24] : memref<2x4x32xf32, #tpu.memory_space<vmem>>, vector<1x4x32xf32>
    %22 = vector.shape_cast %21 : vector<1x4x32xf32> to vector<4x32xf32>
    %cst_25 = arith.constant dense<0.000000e+00> : vector<4x32xf32>
    %23 = tpu.matmul %18, %16, %cst_25 {dimension_numbers = #tpu.dot_dimension_numbers<[1], [0], [0], [1], [0, 0, 1, 1], [], []>} : vector<4x8xf32>, vector<8x32xf32>, vector<4x32xf32> -> vector<4x32xf32>
    %24 = arith.addf %22, %23 : vector<4x32xf32>
    %25 = vector.extract_strided_slice %24 {offsets = [0, 0], sizes = [4, 8], strides = [1, 1]} : vector<4x32xf32> to vector<4x8xf32>
    %26 = arith.negf %25 : vector<4x8xf32>
    %27 = math.exp %26 : vector<4x8xf32>
    %cst_26 = arith.constant 1.000000e+00 : f32
    %28 = vector.broadcast %cst_26 : f32 to vector<4x8xf32>
    %29 = arith.addf %28, %27 : vector<4x8xf32>
    %30 = arith.divf %28, %29 : vector<4x8xf32>
    %31 = vector.extract_strided_slice %24 {offsets = [0, 8], sizes = [4, 8], strides = [1, 1]} : vector<4x32xf32> to vector<4x8xf32>
    %32 = arith.negf %31 : vector<4x8xf32>
    %33 = math.exp %32 : vector<4x8xf32>
    %cst_27 = arith.constant 1.000000e+00 : f32
    %34 = vector.broadcast %cst_27 : f32 to vector<4x8xf32>
    %35 = arith.addf %34, %33 : vector<4x8xf32>
    %36 = arith.divf %34, %35 : vector<4x8xf32>
    %37 = vector.extract_strided_slice %24 {offsets = [0, 16], sizes = [4, 8], strides = [1, 1]} : vector<4x32xf32> to vector<4x8xf32>
    %38 = math.tanh %37 : vector<4x8xf32>
    %39 = vector.extract_strided_slice %24 {offsets = [0, 24], sizes = [4, 8], strides = [1, 1]} : vector<4x32xf32> to vector<4x8xf32>
    %40 = arith.negf %39 : vector<4x8xf32>
    %41 = math.exp %40 : vector<4x8xf32>
    %cst_28 = arith.constant 1.000000e+00 : f32
    %42 = vector.broadcast %cst_28 : f32 to vector<4x8xf32>
    %43 = arith.addf %42, %41 : vector<4x8xf32>
    %44 = arith.divf %42, %43 : vector<4x8xf32>
    %45 = arith.mulf %36, %19 : vector<4x8xf32>
    %46 = arith.mulf %30, %38 : vector<4x8xf32>
    %47 = arith.addf %45, %46 : vector<4x8xf32>
    %48 = math.tanh %47 : vector<4x8xf32>
    %49 = arith.mulf %44, %48 : vector<4x8xf32>
    %50 = arith.index_cast %c0_i32 : i32 to index
    %c0_29 = arith.constant 0 : index
    %c0_30 = arith.constant 0 : index
    %51 = vector.load %arg8[%50, %c0_29, %c0_30] : memref<2x4x8xf32, #tpu.memory_space<vmem>>, vector<1x4x8xf32>
    %52 = vector.shape_cast %51 : vector<1x4x8xf32> to vector<4x8xf32>
    %53 = vector.shape_cast %49 : vector<4x8xf32> to vector<1x4x8xf32>
    tpu.vector_store %arg8[%50, %c0_29, %c0_30], %53 {strides = array<i32>} : memref<2x4x8xf32, #tpu.memory_space<vmem>>, vector<1x4x8xf32>,
    %c1_i32 = arith.constant 1 : i32
    %54 = arith.index_cast %c1_i32 : i32 to index
    %c0_31 = arith.constant 0 : index
    %c0_32 = arith.constant 0 : index
    %55 = vector.load %arg9[%54, %c0_31, %c0_32] : memref<2x4x32xf32, #tpu.memory_space<vmem>>, vector<1x4x32xf32>
    %56 = vector.shape_cast %55 : vector<1x4x32xf32> to vector<4x32xf32>
    %cst_33 = arith.constant dense<0.000000e+00> : vector<4x32xf32>
    %57 = tpu.matmul %49, %16, %cst_33 {dimension_numbers = #tpu.dot_dimension_numbers<[1], [0], [0], [1], [0, 0, 1, 1], [], []>} : vector<4x8xf32>, vector<8x32xf32>, vector<4x32xf32> -> vector<4x32xf32>
    %58 = arith.addf %56, %57 : vector<4x32xf32>
    %59 = vector.extract_strided_slice %58 {offsets = [0, 0], sizes = [4, 8], strides = [1, 1]} : vector<4x32xf32> to vector<4x8xf32>
    %60 = arith.negf %59 : vector<4x8xf32>
    %61 = math.exp %60 : vector<4x8xf32>
    %cst_34 = arith.constant 1.000000e+00 : f32
    %62 = vector.broadcast %cst_34 : f32 to vector<4x8xf32>
    %63 = arith.addf %62, %61 : vector<4x8xf32>
    %64 = arith.divf %62, %63 : vector<4x8xf32>
    %65 = vector.extract_strided_slice %58 {offsets = [0, 8], sizes = [4, 8], strides = [1, 1]} : vector<4x32xf32> to vector<4x8xf32>
    %66 = arith.negf %65 : vector<4x8xf32>
    %67 = math.exp %66 : vector<4x8xf32>
    %cst_35 = arith.constant 1.000000e+00 : f32
    %68 = vector.broadcast %cst_35 : f32 to vector<4x8xf32>
    %69 = arith.addf %68, %67 : vector<4x8xf32>
    %70 = arith.divf %68, %69 : vector<4x8xf32>
    %71 = vector.extract_strided_slice %58 {offsets = [0, 16], sizes = [4, 8], strides = [1, 1]} : vector<4x32xf32> to vector<4x8xf32>
    %72 = math.tanh %71 : vector<4x8xf32>
    %73 = vector.extract_strided_slice %58 {offsets = [0, 24], sizes = [4, 8], strides = [1, 1]} : vector<4x32xf32> to vector<4x8xf32>
    %74 = arith.negf %73 : vector<4x8xf32>
    %75 = math.exp %74 : vector<4x8xf32>
    %cst_36 = arith.constant 1.000000e+00 : f32
    %76 = vector.broadcast %cst_36 : f32 to vector<4x8xf32>
    %77 = arith.addf %76, %75 : vector<4x8xf32>
    %78 = arith.divf %76, %77 : vector<4x8xf32>
    %79 = arith.mulf %70, %47 : vector<4x8xf32>
    %80 = arith.mulf %64, %72 : vector<4x8xf32>
    %81 = arith.addf %79, %80 : vector<4x8xf32>
    %82 = math.tanh %81 : vector<4x8xf32>
    %83 = arith.mulf %78, %82 : vector<4x8xf32>
    %84 = arith.index_cast %c1_i32 : i32 to index
    %c0_37 = arith.constant 0 : index
    %c0_38 = arith.constant 0 : index
    %85 = vector.load %arg8[%84, %c0_37, %c0_38] : memref<2x4x8xf32, #tpu.memory_space<vmem>>, vector<1x4x8xf32>
    %86 = vector.shape_cast %85 : vector<1x4x8xf32> to vector<4x8xf32>
    %87 = vector.shape_cast %83 : vector<4x8xf32> to vector<1x4x8xf32>
    tpu.vector_store %arg8[%84, %c0_37, %c0_38], %87 {strides = array<i32>} : memref<2x4x8xf32, #tpu.memory_space<vmem>>, vector<1x4x8xf32>,
    %c2_i32 = arith.constant 2 : i32
    %c0_i32_39 = arith.constant 0 : i32
    %c1_i32_40 = arith.constant 1 : i32
    %88 = arith.subi %c1_i32_40, %c0_i32_39 : i32
    %89 = arith.index_cast %88 : i32 to index
    %c0_41 = arith.constant 0 : index
    %c0_42 = arith.constant 0 : index
    %90 = vector.load %arg10[%89, %c0_41, %c0_42] : memref<2x4x32xf32, #tpu.memory_space<vmem>>, vector<1x4x32xf32>
    %91 = vector.shape_cast %90 : vector<1x4x32xf32> to vector<4x32xf32>
    %cst_43 = arith.constant dense<0.000000e+00> : vector<4x32xf32>
    %92 = tpu.matmul %18, %17, %cst_43 {dimension_numbers = #tpu.dot_dimension_numbers<[1], [0], [0], [1], [0, 0, 1, 1], [], []>} : vector<4x8xf32>, vector<8x32xf32>, vector<4x32xf32> -> vector<4x32xf32>
    %93 = arith.addf %91, %92 : vector<4x32xf32>
    %94 = vector.extract_strided_slice %93 {offsets = [0, 0], sizes = [4, 8], strides = [1, 1]} : vector<4x32xf32> to vector<4x8xf32>
    %95 = arith.negf %94 : vector<4x8xf32>
    %96 = math.exp %95 : vector<4x8xf32>
    %cst_44 = arith.constant 1.000000e+00 : f32
    %97 = vector.broadcast %cst_44 : f32 to vector<4x8xf32>
    %98 = arith.addf %97, %96 : vector<4x8xf32>
    %99 = arith.divf %97, %98 : vector<4x8xf32>
    %100 = vector.extract_strided_slice %93 {offsets = [0, 8], sizes = [4, 8], strides = [1, 1]} : vector<4x32xf32> to vector<4x8xf32>
    %101 = arith.negf %100 : vector<4x8xf32>
    %102 = math.exp %101 : vector<4x8xf32>
    %cst_45 = arith.constant 1.000000e+00 : f32
    %103 = vector.broadcast %cst_45 : f32 to vector<4x8xf32>
    %104 = arith.addf %103, %102 : vector<4x8xf32>
    %105 = arith.divf %103, %104 : vector<4x8xf32>
    %106 = vector.extract_strided_slice %93 {offsets = [0, 16], sizes = [4, 8], strides = [1, 1]} : vector<4x32xf32> to vector<4x8xf32>
    %107 = math.tanh %106 : vector<4x8xf32>
    %108 = vector.extract_strided_slice %93 {offsets = [0, 24], sizes = [4, 8], strides = [1, 1]} : vector<4x32xf32> to vector<4x8xf32>
    %109 = arith.negf %108 : vector<4x8xf32>
    %110 = math.exp %109 : vector<4x8xf32>
    %cst_46 = arith.constant 1.000000e+00 : f32
    %111 = vector.broadcast %cst_46 : f32 to vector<4x8xf32>
    %112 = arith.addf %111, %110 : vector<4x8xf32>
    %113 = arith.divf %111, %112 : vector<4x8xf32>
    %114 = arith.mulf %105, %19 : vector<4x8xf32>
    %115 = arith.mulf %99, %107 : vector<4x8xf32>
    %116 = arith.addf %114, %115 : vector<4x8xf32>
    %117 = math.tanh %116 : vector<4x8xf32>
    %118 = arith.mulf %113, %117 : vector<4x8xf32>
    %119 = arith.index_cast %88 : i32 to index
    %c0_47 = arith.constant 0 : index
    %c0_48 = arith.constant 0 : index
    %120 = vector.load %arg11[%119, %c0_47, %c0_48] : memref<2x4x8xf32, #tpu.memory_space<vmem>>, vector<1x4x8xf32>
    %121 = vector.shape_cast %120 : vector<1x4x8xf32> to vector<4x8xf32>
    %122 = vector.shape_cast %118 : vector<4x8xf32> to vector<1x4x8xf32>
    tpu.vector_store %arg11[%119, %c0_47, %c0_48], %122 {strides = array<i32>} : memref<2x4x8xf32, #tpu.memory_space<vmem>>, vector<1x4x8xf32>,
    %c1_i32_49 = arith.constant 1 : i32
    %c1_i32_50 = arith.constant 1 : i32
    %123 = arith.subi %c1_i32_50, %c1_i32_49 : i32
    %124 = arith.index_cast %123 : i32 to index
    %c0_51 = arith.constant 0 : index
    %c0_52 = arith.constant 0 : index
    %125 = vector.load %arg10[%124, %c0_51, %c0_52] : memref<2x4x32xf32, #tpu.memory_space<vmem>>, vector<1x4x32xf32>
    %126 = vector.shape_cast %125 : vector<1x4x32xf32> to vector<4x32xf32>
    %cst_53 = arith.constant dense<0.000000e+00> : vector<4x32xf32>
    %127 = tpu.matmul %118, %17, %cst_53 {dimension_numbers = #tpu.dot_dimension_numbers<[1], [0], [0], [1], [0, 0, 1, 1], [], []>} : vector<4x8xf32>, vector<8x32xf32>, vector<4x32xf32> -> vector<4x32xf32>
    %128 = arith.addf %126, %127 : vector<4x32xf32>
    %129 = vector.extract_strided_slice %128 {offsets = [0, 0], sizes = [4, 8], strides = [1, 1]} : vector<4x32xf32> to vector<4x8xf32>
    %130 = arith.negf %129 : vector<4x8xf32>
    %131 = math.exp %130 : vector<4x8xf32>
    %cst_54 = arith.constant 1.000000e+00 : f32
    %132 = vector.broadcast %cst_54 : f32 to vector<4x8xf32>
    %133 = arith.addf %132, %131 : vector<4x8xf32>
    %134 = arith.divf %132, %133 : vector<4x8xf32>
    %135 = vector.extract_strided_slice %128 {offsets = [0, 8], sizes = [4, 8], strides = [1, 1]} : vector<4x32xf32> to vector<4x8xf32>
    %136 = arith.negf %135 : vector<4x8xf32>
    %137 = math.exp %136 : vector<4x8xf32>
    %cst_55 = arith.constant 1.000000e+00 : f32
    %138 = vector.broadcast %cst_55 : f32 to vector<4x8xf32>
    %139 = arith.addf %138, %137 : vector<4x8xf32>
    %140 = arith.divf %138, %139 : vector<4x8xf32>
    %141 = vector.extract_strided_slice %128 {offsets = [0, 16], sizes = [4, 8], strides = [1, 1]} : vector<4x32xf32> to vector<4x8xf32>
    %142 = math.tanh %141 : vector<4x8xf32>
    %143 = vector.extract_strided_slice %128 {offsets = [0, 24], sizes = [4, 8], strides = [1, 1]} : vector<4x32xf32> to vector<4x8xf32>
    %144 = arith.negf %143 : vector<4x8xf32>
    %145 = math.exp %144 : vector<4x8xf32>
    %cst_56 = arith.constant 1.000000e+00 : f32
    %146 = vector.broadcast %cst_56 : f32 to vector<4x8xf32>
    %147 = arith.addf %146, %145 : vector<4x8xf32>
    %148 = arith.divf %146, %147 : vector<4x8xf32>
    %149 = arith.mulf %140, %116 : vector<4x8xf32>
    %150 = arith.mulf %134, %142 : vector<4x8xf32>
    %151 = arith.addf %149, %150 : vector<4x8xf32>
    %152 = math.tanh %151 : vector<4x8xf32>
    %153 = arith.mulf %148, %152 : vector<4x8xf32>
    %154 = arith.index_cast %123 : i32 to index
    %c0_57 = arith.constant 0 : index
    %c0_58 = arith.constant 0 : index
    %155 = vector.load %arg11[%154, %c0_57, %c0_58] : memref<2x4x8xf32, #tpu.memory_space<vmem>>, vector<1x4x8xf32>
    %156 = vector.shape_cast %155 : vector<1x4x8xf32> to vector<4x8xf32>
    %157 = vector.shape_cast %153 : vector<4x8xf32> to vector<1x4x8xf32>
    tpu.vector_store %arg11[%154, %c0_57, %c0_58], %157 {strides = array<i32>} : memref<2x4x8xf32, #tpu.memory_space<vmem>>, vector<1x4x8xf32>,
    %c2_i32_59 = arith.constant 2 : i32
    %c0_60 = arith.constant 0 : index
    %c0_61 = arith.constant 0 : index
    %c0_62 = arith.constant 0 : index
    %158 = vector.load %arg8[%c0_60, %c0_61, %c0_62] : memref<2x4x8xf32, #tpu.memory_space<vmem>>, vector<2x4x8xf32>
    %c0_63 = arith.constant 0 : index
    %c0_64 = arith.constant 0 : index
    %c0_65 = arith.constant 0 : index
    %159 = vector.load %arg11[%c0_63, %c0_64, %c0_65] : memref<2x4x8xf32, #tpu.memory_space<vmem>>, vector<2x4x8xf32>
    %160 = arith.addf %158, %159 : vector<2x4x8xf32>
    %cst_66 = arith.constant 5.000000e-01 : f32
    %161 = vector.broadcast %cst_66 : f32 to vector<2x4x8xf32>
    %162 = arith.mulf %160, %161 : vector<2x4x8xf32>
    %c0_67 = arith.constant 0 : index
    %c0_68 = arith.constant 0 : index
    %c0_69 = arith.constant 0 : index
    %163 = vector.load %arg8[%c0_67, %c0_68, %c0_69] : memref<2x4x8xf32, #tpu.memory_space<vmem>>, vector<2x4x8xf32>
    tpu.vector_store %arg8[%c0_67, %c0_68, %c0_69], %162 {strides = array<i32>} : memref<2x4x8xf32, #tpu.memory_space<vmem>>, vector<2x4x8xf32>,
    return
  }
  func.func @transform_0(%arg0: i32) -> (i32, i32, i32) {
    %c0_i32 = arith.constant 0 : i32
    %c0_i32_0 = arith.constant 0 : i32
    %c0_i32_1 = arith.constant 0 : i32
    return %c0_i32, %arg0, %c0_i32_0 : i32, i32, i32
  }
  func.func @transform_1(%arg0: i32) -> (i32, i32) {
    %c0_i32 = arith.constant 0 : i32
    %c0_i32_0 = arith.constant 0 : i32
    %c0_i32_1 = arith.constant 0 : i32
    return %c0_i32, %c0_i32_0 : i32, i32
  }
  func.func @transform_2(%arg0: i32) -> (i32, i32) {
    %c0_i32 = arith.constant 0 : i32
    %c0_i32_0 = arith.constant 0 : i32
    %c0_i32_1 = arith.constant 0 : i32
    return %c0_i32, %c0_i32_0 : i32, i32
  }
  func.func @transform_3(%arg0: i32) -> (i32, i32) {
    %c0_i32 = arith.constant 0 : i32
    %c0_i32_0 = arith.constant 0 : i32
    %c0_i32_1 = arith.constant 0 : i32
    return %c0_i32, %c0_i32_0 : i32, i32
  }
  func.func @transform_4(%arg0: i32) -> (i32, i32) {
    %c0_i32 = arith.constant 0 : i32
    %c0_i32_0 = arith.constant 0 : i32
    %c0_i32_1 = arith.constant 0 : i32
    return %c0_i32, %c0_i32_0 : i32, i32
  }
  func.func @transform_5(%arg0: i32) -> (i32, i32) {
    %c0_i32 = arith.constant 0 : i32
    %c0_i32_0 = arith.constant 0 : i32
    %c0_i32_1 = arith.constant 0 : i32
    return %c0_i32, %c0_i32_0 : i32, i32
  }
  func.func @transform_6(%arg0: i32) -> (i32, i32) {
    %c0_i32 = arith.constant 0 : i32
    %c0_i32_0 = arith.constant 0 : i32
    %c0_i32_1 = arith.constant 0 : i32
    return %c0_i32, %c0_i32_0 : i32, i32
  }
  func.func @transform_7(%arg0: i32) -> (i32, i32, i32) {
    %c0_i32 = arith.constant 0 : i32
    %c0_i32_0 = arith.constant 0 : i32
    %c0_i32_1 = arith.constant 0 : i32
    return %c0_i32, %arg0, %c0_i32_0 : i32, i32, i32
  }
}

module attributes {stable_mosaic.version = 11 : i64} {
  func.func @_film_kernel(%arg0: i32, %arg1: i32, %arg2: memref<1x4x8xf32, #tpu.memory_space<vmem>>, %arg3: memref<1x4x32xf32, #tpu.memory_space<vmem>>, %arg4: memref<1x4x32xf32, #tpu.memory_space<vmem>>) attributes {dimension_semantics = [#tpu.dimension_semantics<parallel>, #tpu.dimension_semantics<parallel>], iteration_bounds = array<i64: 2, 1>, scalar_prefetch = 0 : i64, scratch_operands = 0 : i64, tpu.core_type = #tpu.core_type<tc>, window_params = [{transform_indices = @transform_0, window_bounds = array<i64: 1, 4, 8>}, {transform_indices = @transform_1, window_bounds = array<i64: 1, 4, 32>}, {transform_indices = @transform_2, window_bounds = array<i64: 1, 4, 32>}]} {
    %c0 = arith.constant 0 : index
    %c0_0 = arith.constant 0 : index
    %c0_1 = arith.constant 0 : index
    %0 = vector.load %arg2[%c0, %c0_0, %c0_1] : memref<1x4x8xf32, #tpu.memory_space<vmem>>, vector<1x4x8xf32>
    %1 = tpu.concatenate %0, %0, %0, %0 in 2 : vector<1x4x8xf32>, vector<1x4x8xf32>, vector<1x4x8xf32>, vector<1x4x8xf32> -> vector<1x4x32xf32>
    %c0_2 = arith.constant 0 : index
    %c0_3 = arith.constant 0 : index
    %c0_4 = arith.constant 0 : index
    %2 = vector.load %arg3[%c0_2, %c0_3, %c0_4] : memref<1x4x32xf32, #tpu.memory_space<vmem>>, vector<1x4x32xf32>
    %3 = arith.mulf %2, %1 : vector<1x4x32xf32>
    %c0_5 = arith.constant 0 : index
    %c0_6 = arith.constant 0 : index
    %c0_7 = arith.constant 0 : index
    %4 = vector.load %arg4[%c0_5, %c0_6, %c0_7] : memref<1x4x32xf32, #tpu.memory_space<vmem>>, vector<1x4x32xf32>
    tpu.vector_store %arg4[%c0_5, %c0_6, %c0_7], %3 {strides = array<i32>} : memref<1x4x32xf32, #tpu.memory_space<vmem>>, vector<1x4x32xf32>,
    return
  }
  func.func @transform_0(%arg0: i32, %arg1: i32) -> (i32, i32, i32) {
    %c0_i32 = arith.constant 0 : i32
    %c0_i32_0 = arith.constant 0 : i32
    return %arg0, %arg1, %c0_i32 : i32, i32, i32
  }
  func.func @transform_1(%arg0: i32, %arg1: i32) -> (i32, i32, i32) {
    %c0_i32 = arith.constant 0 : i32
    %c0_i32_0 = arith.constant 0 : i32
    return %arg0, %arg1, %c0_i32 : i32, i32, i32
  }
  func.func @transform_2(%arg0: i32, %arg1: i32) -> (i32, i32, i32) {
    %c0_i32 = arith.constant 0 : i32
    %c0_i32_0 = arith.constant 0 : i32
    return %arg0, %arg1, %c0_i32 : i32, i32, i32
  }
}

</mosaic_0001>

<llo_original>
// kernel: tfilm_forward.3
$region0: #{tfilm_forward.3}
  #allocation0 [shape = 'u32[]', space=smem, size = 0x4, offset = 0x4, fixed_abs, tag = 'smem constant byte address 0x4 - core index']
  #allocation1 [shape = 'u32[144,128]{1,0:T(1,128)}', space=vmem, size = 0x12000, scoped, tag = 'internal scratch']
  %s0 = inlined_call_operand.vmem [shape: f32[2,4,8], index: 0, kind: input, shape index: {}]
  %s1 = inlined_call_operand.vmem [shape: f32[2,4,32], index: 1, kind: input, shape index: {}, may-alias: {1,2}]
  %s2 = inlined_call_operand.vmem [shape: f32[2,4,32], index: 2, kind: output, shape index: {}, may-alias: {1,2}]
  %s3 = sld [smem:[#allocation0]]
  $region41: #{tfilm_forward.3} parent=0
    _
  %s5 = ssub.s32 1, %s3
  %s6 = scalar_select 0, %s5, %s3
  loop: start=0, step=1, limit=4
  $region2: #{tfilm_forward.3} parent=0 // loop_pre_header
    _
  $region3: #{tfilm_forward.3} parent=0 // loop_header
    %s8 = sphi 0, %s12
    %p9 = scmp.ge.s32.totalorder %s8, 4
    %s15 = sphi 0, %s27
    %s16 = sphi 0, %s23
    %s17 = sphi 0, %s15
    %s18 = sphi 0, %s16
    %s19 = sphi 0, %s17
    %s20 = sphi 0, %s18
    %s32 = sphi 0, %s34
    %s35 = sphi 0, %s32
    %s36 = sphi 0, %s35
    %s52 = sphi 0, %s36
    %s60 = sphi 0, %s62
    %s63 = sphi 0, %s60
    %s64 = sphi 0, %s63
    %s80 = sphi 0, %s64
    %s88 = sphi 0, %s90
    %s91 = sphi 0, %s88
    %s92 = sphi 0, %s91
    %s108 = sphi 0, %s92
  $region4: #{tfilm_forward.3} parent=0 // loop_header_branch
    %11 = sbr.rel (%p9) target = $region8
  $region5: #{tfilm_forward.3} parent=0 // loop_body
    %s13 = ssub.s32 %s8, 1
    %s14 = ssub.s32 %s8, 2
    %s21 = sadd.s32 1, %s16
    %p22 = scmp.ge.s32.totalorder %s21, 1
    %s23 = scalar_select %p22, 0, %s21
    %s24 = sadd.s32 1, %s15
    %s25 = scalar_select %p22, %s24, %s15
    %p26 = scmp.ge.s32.totalorder %s25, 2
    %s27 = scalar_select %p26, 0, %s25
    %s28 = ssub.s32 %s15, %s27
    %s29 = ssub.s32 %s16, %s23
    %s30 = sor.u32 %s28, %s29
    %p31 = scmp.eq.s32.totalorder %s30, 0
    %s33 = sadd.s32 %s32, 1
    %s34 = scalar_select %p31, %s32, %s33
    %p37 = pneg %p31
    %p38 = scmp.eq.s32.totalorder %s8, 1
    %p39 = por %p37, %p38
    %p40 = scmp.ne.s32.totalorder %s32, %s35
    %p41 = scmp.eq.s32.totalorder %s8, 0
    %p42 = por %p40, %p41
    %p43 = scmp.ne.s32.totalorder %s32, %s35
    %p44 = scmp.eq.s32.totalorder %s13, 1
    %p45 = por %p43, %p44
    %p46 = scmp.ne.s32.totalorder %s35, %s36
    %p47 = scmp.eq.s32.totalorder %s13, 0
    %p48 = por %p46, %p47
    %p49 = scmp.ne.s32.totalorder %s35, %s36
    %p50 = scmp.eq.s32.totalorder %s14, 1
    %p51 = por %p49, %p50
    %p53 = scmp.ne.s32.totalorder %s36, %s52
    %p54 = scmp.eq.s32.totalorder %s14, 0
    %p55 = por %p53, %p54
    %s56 = ssub.s32 %s15, %s27
    %s57 = ssub.s32 %s16, %s23
    %s58 = sor.u32 %s56, %s57
    %p59 = scmp.eq.s32.totalorder %s58, 0
    %s61 = sadd.s32 %s60, 1
    %s62 = scalar_select %p59, %s60, %s61
    %p65 = pneg %p59
    %p66 = scmp.eq.s32.totalorder %s8, 1
    %p67 = por %p65, %p66
    %p68 = scmp.ne.s32.totalorder %s60, %s63
    %p69 = scmp.eq.s32.totalorder %s8, 0
    %p70 = por %p68, %p69
    %p71 = scmp.ne.s32.totalorder %s60, %s63
    %p72 = scmp.eq.s32.totalorder %s13, 1
    %p73 = por %p71, %p72
    %p74 = scmp.ne.s32.totalorder %s63, %s64
    %p75 = scmp.eq.s32.totalorder %s13, 0
    %p76 = por %p74, %p75
    %p77 = scmp.ne.s32.totalorder %s63, %s64
    %p78 = scmp.eq.s32.totalorder %s14, 1
    %p79 = por %p77, %p78
    %p81 = scmp.ne.s32.totalorder %s64, %s80
    %p82 = scmp.eq.s32.totalorder %s14, 0
    %p83 = por %p81, %p82
    %s84 = ssub.s32 %s15, %s27
    %s85 = ssub.s32 %s16, %s23
    %s86 = sor.u32 %s84, %s85
    %p87 = scmp.eq.s32.totalorder %s86, 0
    %s89 = sadd.s32 %s88, 1
    %s90 = scalar_select %p87, %s88, %s89
    %p93 = pneg %p87
    %p94 = scmp.eq.s32.totalorder %s8, 1
    %p95 = por %p93, %p94
    %p96 = scmp.ne.s32.totalorder %s88, %s91
    %p97 = scmp.eq.s32.totalorder %s8, 0
    %p98 = por %p96, %p97
    %p99 = scmp.ne.s32.totalorder %s88, %s91
    %p100 = scmp.eq.s32.totalorder %s13, 1
    %p101 = por %p99, %p100
    %p102 = scmp.ne.s32.totalorder %s91, %s92
    %p103 = scmp.eq.s32.totalorder %s13, 0
    %p104 = por %p102, %p103
    %p105 = scmp.ne.s32.totalorder %s91, %s92
    %p106 = scmp.eq.s32.totalorder %s14, 1
    %p107 = por %p105, %p106
    %p109 = scmp.ne.s32.totalorder %s92, %s108
    %p110 = scmp.eq.s32.totalorder %s14, 0
    %p111 = por %p109, %p110
    %p112 = scmp.le.s32.totalorder 1, %s8
    %p113 = scmp.lt.s32.totalorder %s8, 3
    %p114 = pnand %p112, %p113
    %p115 = pneg %p114
    // Predicated region
    $region9: #{tfilm_forward.3} parent=5 // pred_check
      _
    $region10: #{tfilm_forward.3} parent=5 // pred_check_branch
      %117 = sbr.rel (%p114) target = $region12
    $region11: #{tfilm_forward.3} parent=5 // pred_region
      %s118 = ssub.s32 %s8, 1
    $region12: #{tfilm_forward.3} parent=5 // pred_fallthru
      _
    %p119 = scmp.lt.s32.totalorder %s8, 2
    // Predicated region
    $region13: #{tfilm_forward.3} parent=5 // pred_check
      %p120 = pneg %p119
    $region14: #{tfilm_forward.3} parent=5 // pred_check_branch
      %122 = sbr.rel (%p120) target = $region16
    $region15: #{tfilm_forward.3} parent=5 // pred_region
      // Predicated region
      $region17: #{tfilm_forward.3} parent=15 // pred_check
        %p123 = pneg %p42
      $region18: #{tfilm_forward.3} parent=15 // pred_check_branch
        %125 = sbr.rel (%p123) target = $region20
      $region19: #{tfilm_forward.3} parent=15 // pred_region
        %p126 = scmp.lt.s32.totalorder %s15, 1
        %s127 = scalar_select %p126, %s15, 1
        %p128 = scmp.lt.s32.totalorder %s16, 0
        %s129 = scalar_select %p128, %s16, 0
        %s130 = sadd.s32 %s129, %s127
        %s131 = smul.addr %s130, 4
        %s132 = scalar_lea.vmem %s0, %s131
      $region20: #{tfilm_forward.3} parent=15 // pred_fallthru
        _
      // Predicated region
      $region21: #{tfilm_forward.3} parent=15 // pred_check
        %p133 = pneg %p70
      $region22: #{tfilm_forward.3} parent=15 // pred_check_branch
        %135 = sbr.rel (%p133) target = $region24
      $region23: #{tfilm_forward.3} parent=15 // pred_region
        %p136 = scmp.lt.s32.totalorder %s15, 1
        %s137 = scalar_select %p136, %s15, 1
        %p138 = scmp.lt.s32.totalorder %s16, 0
        %s139 = scalar_select %p138, %s16, 0
        %s140 = sadd.s32 %s139, %s137
        %s141 = smul.addr %s140, 4
        %s142 = scalar_lea.vmem %s1, %s141
      $region24: #{tfilm_forward.3} parent=15 // pred_fallthru
        _
    $region16: #{tfilm_forward.3} parent=5 // pred_fallthru
      _
    %p143 = scmp.le.s32.totalorder 1, %s8
    %p144 = scmp.lt.s32.totalorder %s8, 3
    %p145 = pnand %p143, %p144
    %p146 = pneg %p145
    // Predicated region
    $region25: #{tfilm_forward.3} parent=5 // pred_check
      _
    $region26: #{tfilm_forward.3} parent=5 // pred_check_branch
      %148 = sbr.rel (%p145) target = $region28
    $region27: #{tfilm_forward.3} parent=5 // pred_region
      %s149 = ssub.s32 %s8, 1
      %p150 = scmp.lt.s32.totalorder %s17, 1
      %s151 = scalar_select %p150, %s17, 1
      %p152 = scmp.lt.s32.totalorder %s18, 0
      %s153 = scalar_select %p152, %s18, 0
      %s154 = sadd.s32 %s153, %s151
      %s155 = smul.addr %s154, 4
      %s156 = scalar_lea.vmem %s0, %s155
      %p157 = pneg %p48
      %p158 = pneg %p45
      %p159 = scmp.lt.s32.totalorder %s17, 1
      %s160 = scalar_select %p159, %s17, 1
      %p161 = scmp.lt.s32.totalorder %s18, 0
      %s162 = scalar_select %p161, %s18, 0
      %s163 = sadd.s32 %s162, %s160
      %s164 = smul.addr %s163, 4
      %s165 = scalar_lea.vmem %s1, %s164
      %p166 = pneg %p76
      %p167 = pneg %p73
      %p168 = pneg %p104
      %p169 = pneg %p101
      %p170 = scmp.lt.s32.totalorder %s17, 1
      %s171 = scalar_select %p170, %s17, 1
      %p172 = scmp.lt.s32.totalorder %s18, 0
      %s173 = scalar_select %p172, %s18, 0
      %s174 = sadd.s32 %s173, %s171
      %s175 = smul.addr %s174, 4
      %s176 = scalar_lea.vmem %s2, %s175
      %p177 = scmp.lt.s32.totalorder %s17, 1
      %s178 = scalar_select %p177, %s17, 1
      %p179 = scmp.lt.s32.totalorder %s18, 0
      %s180 = scalar_select %p179, %s18, 0
      %s181 = sadd.s32 %s180, %s178
      %s182 = smul.addr %s181, 4
      %s183 = scalar_lea.vmem %s0, %s182
      %p184 = scmp.lt.s32.totalorder %s17, 1
      %s185 = scalar_select %p184, %s17, 1
      %p186 = scmp.lt.s32.totalorder %s18, 0
      %s187 = scalar_select %p186, %s18, 0
      %s188 = sadd.s32 %s187, %s185
      %s189 = smul.addr %s188, 4
      %s190 = scalar_lea.vmem %s1, %s189
      %p191 = scmp.lt.s32.totalorder %s17, 1
      %s192 = scalar_select %p191, %s17, 1
      %p193 = scmp.lt.s32.totalorder %s18, 0
      %s194 = scalar_select %p193, %s18, 0
      %s195 = sadd.s32 %s194, %s192
      %s196 = smul.addr %s195, 4
      %s197 = scalar_lea.vmem %s2, %s196
      %v198 = vld [vmem:[%s183] sm:$0xf]
      %200 = vrot.lane.b32.xlu0 %v198, 8
      %v201 = vpop.permute.xlu0 %200
      %203 = vrot.lane.b32.xlu0 %v198, 16
      %v204 = vpop.permute.xlu0 %203
      %206 = vrot.lane.b32.xlu0 %v198, 24
      %v207 = vpop.permute.xlu0 %206
      %vm209 = vcmask 64512
      %v210 = vsel %vm209, %v198, %v201
      %vm211 = vcmask 130048
      %v212 = vsel %vm211, %v210, %v204
      %vm213 = vcmask 195584
      %v214 = vsel %vm213, %v212, %v207
      %v215 = vld [vmem:[%s190] sm:$0xf]
      %v216 = vmul.f32 %v215, %v214
      %vm217 = vcmask 257024
      %218 = vst.msk [vmem:[%s197] sm:$0xf] %vm217, %v216
      %p219 = scmp.lt.s32.totalorder %s17, 1
      %s220 = scalar_select %p219, %s17, 1
      %p221 = scmp.lt.s32.totalorder %s18, 0
      %s222 = scalar_select %p221, %s18, 0
      %s223 = sadd.s32 %s222, %s220
      %s224 = smul.addr %s223, 4
      %s225 = scalar_lea.vmem %s2, %s224
      // Predicated region
      $region29: #{tfilm_forward.3} parent=27 // pred_check
        %p226 = pneg %p101
      $region30: #{tfilm_forward.3} parent=27 // pred_check_branch
        %228 = sbr.rel (%p226) target = $region32
      $region31: #{tfilm_forward.3} parent=27 // pred_region
        _
      $region32: #{tfilm_forward.3} parent=27 // pred_fallthru
        _
    $region28: #{tfilm_forward.3} parent=5 // pred_fallthru
      _
    %p229 = scmp.le.s32.totalorder 2, %s8
    // Predicated region
    $region33: #{tfilm_forward.3} parent=5 // pred_check
      %p230 = pneg %p229
    $region34: #{tfilm_forward.3} parent=5 // pred_check_branch
      %232 = sbr.rel (%p230) target = $region36
    $region35: #{tfilm_forward.3} parent=5 // pred_region
      %s233 = ssub.s32 %s8, 2
      // Predicated region
      $region37: #{tfilm_forward.3} parent=35 // pred_check
        %p234 = pneg %p107
      $region38: #{tfilm_forward.3} parent=35 // pred_check_branch
        %236 = sbr.rel (%p234) target = $region40
      $region39: #{tfilm_forward.3} parent=35 // pred_region
        %p237 = scmp.lt.s32.totalorder %s19, 1
        %s238 = scalar_select %p237, %s19, 1
        %p239 = scmp.lt.s32.totalorder %s20, 0
        %s240 = scalar_select %p239, %s20, 0
        %s241 = sadd.s32 %s240, %s238
        %s242 = smul.addr %s241, 4
        %s243 = scalar_lea.vmem %s2, %s242
      $region40: #{tfilm_forward.3} parent=35 // pred_fallthru
        _
    $region36: #{tfilm_forward.3} parent=5 // pred_fallthru
      _
  $region6: #{tfilm_forward.3} parent=0 // loop_footer
    %s12 = sadd.s32 1, %s8
  $region7: #{tfilm_forward.3} parent=0 // loop_footer_branch
    %7 = sbr.rel target = $region3
  $region8: #{tfilm_forward.3} parent=0 // loop_exit
    _

// kernel: tfilm_forward.2
$region0: #{tfilm_forward.2}
  #allocation0 [shape = 'u32[]', space=smem, size = 0x4, offset = 0x4, fixed_abs, tag = 'smem constant byte address 0x4 - core index']
  #allocation1 [shape = 'u32[144,128]{1,0:T(1,128)}', space=vmem, size = 0x12000, scoped, tag = 'internal scratch']
  #allocation2 [shape = 'f32[2,4,32]{2,1,0:T(4,128)}', space=vmem, size = 0x1000, scoped, tag = 'scratch operand']
  #allocation3 [shape = 'f32[2,4,32]{2,1,0:T(4,128)}', space=vmem, size = 0x1000, scoped, tag = 'scratch operand']
  #allocation4 [shape = 'f32[2,4,8]{2,1,0:T(4,128)}', space=vmem, size = 0x1000, scoped, tag = 'scratch operand']
  %s0 = inlined_call_operand.vmem [shape: f32[2,4,8], index: 0, kind: input, shape index: {}]
  %s1 = inlined_call_operand.vmem [shape: f32[8,32], index: 1, kind: input, shape index: {}]
  %s2 = inlined_call_operand.vmem [shape: f32[8,32], index: 2, kind: input, shape index: {}]
  %s3 = inlined_call_operand.vmem [shape: f32[1,32], index: 3, kind: input, shape index: {}]
  %s4 = inlined_call_operand.vmem [shape: f32[8,32], index: 4, kind: input, shape index: {}]
  %s5 = inlined_call_operand.vmem [shape: f32[8,32], index: 5, kind: input, shape index: {}]
  %s6 = inlined_call_operand.vmem [shape: f32[1,32], index: 6, kind: input, shape index: {}]
  %s7 = inlined_call_operand.vmem [shape: f32[2,4,8], index: 7, kind: output, shape index: {}]
  %s8 = sld [smem:[#allocation0]]
  $region38: #{tfilm_forward.2} parent=0
    _
  %s10 = ssub.s32 1, %s8
  %s11 = scalar_select 0, %s10, %s8
  // Predicated region
  $region2: #{tfilm_forward.2} parent=0 // pred_check
    _
  $region3: #{tfilm_forward.2} parent=0 // pred_check_branch
    %13 = sbr.rel (0) target = $region5
  $region4: #{tfilm_forward.2} parent=0 // pred_region
    _
  $region5: #{tfilm_forward.2} parent=0 // pred_fallthru
    _
  // Predicated region
  $region6: #{tfilm_forward.2} parent=0 // pred_check
    _
  $region7: #{tfilm_forward.2} parent=0 // pred_check_branch
    %15 = sbr.rel (0) target = $region9
  $region8: #{tfilm_forward.2} parent=0 // pred_region
    _
  $region9: #{tfilm_forward.2} parent=0 // pred_fallthru
    _
  // Predicated region
  $region10: #{tfilm_forward.2} parent=0 // pred_check
    _
  $region11: #{tfilm_forward.2} parent=0 // pred_check_branch
    %17 = sbr.rel (0) target = $region13
  $region12: #{tfilm_forward.2} parent=0 // pred_region
    _
  $region13: #{tfilm_forward.2} parent=0 // pred_fallthru
    _
  // Predicated region
  $region14: #{tfilm_forward.2} parent=0 // pred_check
    _
  $region15: #{tfilm_forward.2} parent=0 // pred_check_branch
    %19 = sbr.rel (0) target = $region17
  $region16: #{tfilm_forward.2} parent=0 // pred_region
    _
  $region17: #{tfilm_forward.2} parent=0 // pred_fallthru
    _
  // Predicated region
  $region18: #{tfilm_forward.2} parent=0 // pred_check
    _
  $region19: #{tfilm_forward.2} parent=0 // pred_check_branch
    %21 = sbr.rel (0) target = $region21
  $region20: #{tfilm_forward.2} parent=0 // pred_region
    _
  $region21: #{tfilm_forward.2} parent=0 // pred_fallthru
    _
  // Predicated region
  $region22: #{tfilm_forward.2} parent=0 // pred_check
    _
  $region23: #{tfilm_forward.2} parent=0 // pred_check_branch
    %23 = sbr.rel (0) target = $region25
  $region24: #{tfilm_forward.2} parent=0 // pred_region
    _
  $region25: #{tfilm_forward.2} parent=0 // pred_fallthru
    _
  // Predicated region
  $region26: #{tfilm_forward.2} parent=0 // pred_check
    _
  $region27: #{tfilm_forward.2} parent=0 // pred_check_branch
    %25 = sbr.rel (0) target = $region29
  $region28: #{tfilm_forward.2} parent=0 // pred_region
    _
  $region29: #{tfilm_forward.2} parent=0 // pred_fallthru
    _
  %v26 = vld [vmem:[%s0] sm:$0xf]
  %v27 = vld [vmem:[%s0 + $0x4] sm:$0xf]
  %v28 = vld [vmem:[%s1] sm:$0xff]
  %v29 = vld [vmem:[%s4] sm:$0xff]
  %v30 = vld [vmem:[%s3] sm:$0x1]
  %v32 = vlaneseq
  %v33 = vshrl.u32 %v32, 7
  %v34 = vsub.s32 0, %v33
  %v35 = vrot.slane %v30, %v34
  %v39 = vcombine.low %v26, %v27
  %vm40 = vcmask 64512
  %v41 = vsel %vm40, %v39, 0
  %43 = vmatprep.subr.mxu0 0.0
  %44 = vmatpush1.msra.mxu0 %v28
  %45 = vmatprep.subr.mxu0 0.0
  %46 = vmatpush1.msra.mxu0 0.0
  %47 = vmatprep.subr.mxu0 0.0
  %48 = vmatpush1.msra.mxu0 0.0
  %49 = vmatprep.subr.mxu0 0.0
  %50 = vmatpush1.msra.mxu0 0.0
  %51 = vmatprep.subr.mxu0 0.0
  %52 = vmatpush1.msra.mxu0 0.0
  %53 = vmatprep.subr.mxu0 0.0
  %54 = vmatpush1.msra.mxu0 0.0
  %55 = vmatprep.subr.mxu0 0.0
  %56 = vmatpush1.msra.mxu0 0.0
  %57 = vmatprep.subr.mxu0 0.0
  %58 = vmatpush1.msra.mxu0 0.0
  %59 = vmatprep.subr.mxu0 0.0
  %60 = vmatpush1.msra.mxu0 0.0
  %61 = vmatprep.subr.mxu0 0.0
  %62 = vmatpush1.msra.mxu0 0.0
  %63 = vmatprep.subr.mxu0 0.0
  %64 = vmatpush1.msra.mxu0 0.0
  %65 = vmatprep.subr.mxu0 0.0
  %66 = vmatpush1.msra.mxu0 0.0
  %67 = vmatprep.subr.mxu0 0.0
  %68 = vmatpush1.msra.mxu0 0.0
  %69 = vmatprep.subr.mxu0 0.0
  %70 = vmatpush1.msra.mxu0 0.0
  %71 = vmatprep.subr.mxu0 0.0
  %72 = vmatpush1.msra.mxu0 0.0
  %73 = vmatprep.subr.mxu0 0.0
  %74 = vmatpush1.msra.mxu0 0.0
  %75 = vmatprep.subr.mxu0 0.0
  %76 = vmatpush1.msra.mxu0 0.0
  %77 = vmatprep.subr.mxu0 0.0
  %78 = vmatpush1.msra.mxu0 0.0
  %79 = vmatprep.subr.mxu0 0.0
  %80 = vmatpush1.msra.mxu0 0.0
  %81 = vmatprep.subr.mxu0 0.0
  %82 = vmatpush1.msra.mxu0 0.0
  %83 = vmatprep.subr.mxu0 0.0
  %84 = vmatpush1.msra.mxu0 0.0
  %85 = vmatprep.subr.mxu0 0.0
  %86 = vmatpush1.msra.mxu0 0.0
  %87 = vmatprep.subr.mxu0 0.0
  %88 = vmatpush1.msra.mxu0 0.0
  %89 = vmatprep.subr.mxu0 0.0
  %90 = vmatpush1.msra.mxu0 0.0
  %91 = vmatprep.subr.mxu0 0.0
  %92 = vmatpush1.msra.mxu0 0.0
  %93 = vmatprep.subr.mxu0 0.0
  %94 = vmatpush1.msra.mxu0 0.0
  %95 = vmatprep.subr.mxu0 0.0
  %96 = vmatpush1.msra.mxu0 0.0
  %97 = vmatprep.subr.mxu0 0.0
  %98 = vmatpush1.msra.mxu0 0.0
  %99 = vmatprep.subr.mxu0 0.0
  %100 = vmatpush1.msra.mxu0 0.0
  %101 = vmatprep.subr.mxu0 0.0
  %102 = vmatpush1.msra.mxu0 0.0
  %103 = vmatprep.subr.mxu0 0.0
  %104 = vmatpush1.msra.mxu0 0.0
  %105 = vmatprep.subr.mxu0 0.0
  %106 = vmatpush1.msra.mxu0 0.0
  %107 = vmatprep.mubr.f32.mxu0 0.0
  %108 = vmatmul.mubr.f32.gmra.mrb[0].mxu0 %v41
  %v109 = vpop.f32.mrb[0].mxu0
  %v110 = vadd.f32 %v35, %v109
  %v111 = vpop.f32.mrb[0].mxu0
  %112 = vdwg.mxu0
  %v114 = vcombine.high %v110, %v110
  %vm116 = vcmask 257024
  %117 = vst.msk [vmem:[#allocation2] sm:$0xf] %vm116, %v110
  %118 = vst.msk [vmem:[#allocation2 + $0x4] sm:$0xf] %vm116, %v114
  %v119 = vld [vmem:[%s6] sm:$0x1]
  %v121 = vlaneseq
  %v122 = vshrl.u32 %v121, 7
  %v123 = vsub.s32 0, %v122
  %v124 = vrot.slane %v119, %v123
  %126 = vmatprep.subr.mxu0 0.0
  %127 = vmatpush1.msra.mxu0 %v29
  %128 = vmatprep.subr.mxu0 0.0
  %129 = vmatpush1.msra.mxu0 0.0
  %130 = vmatprep.subr.mxu0 0.0
  %131 = vmatpush1.msra.mxu0 0.0
  %132 = vmatprep.subr.mxu0 0.0
  %133 = vmatpush1.msra.mxu0 0.0
  %134 = vmatprep.subr.mxu0 0.0
  %135 = vmatpush1.msra.mxu0 0.0
  %136 = vmatprep.subr.mxu0 0.0
  %137 = vmatpush1.msra.mxu0 0.0
  %138 = vmatprep.subr.mxu0 0.0
  %139 = vmatpush1.msra.mxu0 0.0
  %140 = vmatprep.subr.mxu0 0.0
  %141 = vmatpush1.msra.mxu0 0.0
  %142 = vmatprep.subr.mxu0 0.0
  %143 = vmatpush1.msra.mxu0 0.0
  %144 = vmatprep.subr.mxu0 0.0
  %145 = vmatpush1.msra.mxu0 0.0
  %146 = vmatprep.subr.mxu0 0.0
  %147 = vmatpush1.msra.mxu0 0.0
  %148 = vmatprep.subr.mxu0 0.0
  %149 = vmatpush1.msra.mxu0 0.0
  %150 = vmatprep.subr.mxu0 0.0
  %151 = vmatpush1.msra.mxu0 0.0
  %152 = vmatprep.subr.mxu0 0.0
  %153 = vmatpush1.msra.mxu0 0.0
  %154 = vmatprep.subr.mxu0 0.0
  %155 = vmatpush1.msra.mxu0 0.0
  %156 = vmatprep.subr.mxu0 0.0
  %157 = vmatpush1.msra.mxu0 0.0
  %158 = vmatprep.subr.mxu0 0.0
  %159 = vmatpush1.msra.mxu0 0.0
  %160 = vmatprep.subr.mxu0 0.0
  %161 = vmatpush1.msra.mxu0 0.0
  %162 = vmatprep.subr.mxu0 0.0
  %163 = vmatpush1.msra.mxu0 0.0
  %164 = vmatprep.subr.mxu0 0.0
  %165 = vmatpush1.msra.mxu0 0.0
  %166 = vmatprep.subr.mxu0 0.0
  %167 = vmatpush1.msra.mxu0 0.0
  %168 = vmatprep.subr.mxu0 0.0
  %169 = vmatpush1.msra.mxu0 0.0
  %170 = vmatprep.subr.mxu0 0.0
  %171 = vmatpush1.msra.mxu0 0.0
  %172 = vmatprep.subr.mxu0 0.0
  %173 = vmatpush1.msra.mxu0 0.0
  %174 = vmatprep.subr.mxu0 0.0
  %175 = vmatpush1.msra.mxu0 0.0
  %176 = vmatprep.subr.mxu0 0.0
  %177 = vmatpush1.msra.mxu0 0.0
  %178 = vmatprep.subr.mxu0 0.0
  %179 = vmatpush1.msra.mxu0 0.0
  %180 = vmatprep.subr.mxu0 0.0
  %181 = vmatpush1.msra.mxu0 0.0
  %182 = vmatprep.subr.mxu0 0.0
  %183 = vmatpush1.msra.mxu0 0.0
  %184 = vmatprep.subr.mxu0 0.0
  %185 = vmatpush1.msra.mxu0 0.0
  %186 = vmatprep.subr.mxu0 0.0
  %187 = vmatpush1.msra.mxu0 0.0
  %188 = vmatprep.subr.mxu0 0.0
  %189 = vmatpush1.msra.mxu0 0.0
  %190 = vmatprep.mubr.f32.mxu0 0.0
  %191 = vmatmul.mubr.f32.gmra.mrb[0].mxu0 %v41
  %v192 = vpop.f32.mrb[0].mxu0
  %v193 = vadd.f32 %v124, %v192
  %v194 = vpop.f32.mrb[0].mxu0
  %195 = vdwg.mxu0
  %v197 = vcombine.high %v193, %v193
  %199 = vst.msk [vmem:[#allocation3] sm:$0xf] %vm116, %v193
  %200 = vst.msk [vmem:[#allocation3 + $0x4] sm:$0xf] %vm116, %v197
  %v201 = vld [vmem:[%s2] sm:$0xff]
  %v202 = vld [vmem:[%s5] sm:$0xff]
  %v203 = vld [vmem:[#allocation2] sm:$0xf]
  %v205 = vsel %vm40, 0.0, 0
  %207 = vmatprep.subr.mxu0 0.0
  %208 = vmatpush1.msra.mxu0 %v201
  %209 = vmatprep.subr.mxu0 0.0
  %210 = vmatpush1.msra.mxu0 0.0
  %211 = vmatprep.subr.mxu0 0.0
  %212 = vmatpush1.msra.mxu0 0.0
  %213 = vmatprep.subr.mxu0 0.0
  %214 = vmatpush1.msra.mxu0 0.0
  %215 = vmatprep.subr.mxu0 0.0
  %216 = vmatpush1.msra.mxu0 0.0
  %217 = vmatprep.subr.mxu0 0.0
  %218 = vmatpush1.msra.mxu0 0.0
  %219 = vmatprep.subr.mxu0 0.0
  %220 = vmatpush1.msra.mxu0 0.0
  %221 = vmatprep.subr.mxu0 0.0
  %222 = vmatpush1.msra.mxu0 0.0
  %223 = vmatprep.subr.mxu0 0.0
  %224 = vmatpush1.msra.mxu0 0.0
  %225 = vmatprep.subr.mxu0 0.0
  %226 = vmatpush1.msra.mxu0 0.0
  %227 = vmatprep.subr.mxu0 0.0
  %228 = vmatpush1.msra.mxu0 0.0
  %229 = vmatprep.subr.mxu0 0.0
  %230 = vmatpush1.msra.mxu0 0.0
  %231 = vmatprep.subr.mxu0 0.0
  %232 = vmatpush1.msra.mxu0 0.0
  %233 = vmatprep.subr.mxu0 0.0
  %234 = vmatpush1.msra.mxu0 0.0
  %235 = vmatprep.subr.mxu0 0.0
  %236 = vmatpush1.msra.mxu0 0.0
  %237 = vmatprep.subr.mxu0 0.0
  %238 = vmatpush1.msra.mxu0 0.0
  %239 = vmatprep.subr.mxu0 0.0
  %240 = vmatpush1.msra.mxu0 0.0
  %241 = vmatprep.subr.mxu0 0.0
  %242 = vmatpush1.msra.mxu0 0.0
  %243 = vmatprep.subr.mxu0 0.0
  %244 = vmatpush1.msra.mxu0 0.0
  %245 = vmatprep.subr.mxu0 0.0
  %246 = vmatpush1.msra.mxu0 0.0
  %247 = vmatprep.subr.mxu0 0.0
  %248 = vmatpush1.msra.mxu0 0.0
  %249 = vmatprep.subr.mxu0 0.0
  %250 = vmatpush1.msra.mxu0 0.0
  %251 = vmatprep.subr.mxu0 0.0
  %252 = vmatpush1.msra.mxu0 0.0
  %253 = vmatprep.subr.mxu0 0.0
  %254 = vmatpush1.msra.mxu0 0.0
  %255 = vmatprep.subr.mxu0 0.0
  %256 = vmatpush1.msra.mxu0 0.0
  %257 = vmatprep.subr.mxu0 0.0
  %258 = vmatpush1.msra.mxu0 0.0
  %259 = vmatprep.subr.mxu0 0.0
  %260 = vmatpush1.msra.mxu0 0.0
  %261 = vmatprep.subr.mxu0 0.0
  %262 = vmatpush1.msra.mxu0 0.0
  %263 = vmatprep.subr.mxu0 0.0
  %264 = vmatpush1.msra.mxu0 0.0
  %265 = vmatprep.subr.mxu0 0.0
  %266 = vmatpush1.msra.mxu0 0.0
  %267 = vmatprep.subr.mxu0 0.0
  %268 = vmatpush1.msra.mxu0 0.0
  %269 = vmatprep.subr.mxu0 0.0
  %270 = vmatpush1.msra.mxu0 0.0
  %271 = vmatprep.mubr.f32.mxu0 0.0
  %272 = vmatmul.mubr.f32.gmra.mrb[0].mxu0 %v205
  %v273 = vpop.f32.mrb[0].mxu0
  %v274 = vadd.f32 0.0, %v273
  %v275 = vpop.f32.mrb[0].mxu0
  %276 = vdwg.mxu0
  %v277 = vadd.f32 %v203, %v274
  %v278 = vxor.u32 %v277, 2147483648
  %v279 = vmul.f32 %v278, 1.442695
  %v280 = vpow.pop %v279
  %v281 = vadd.f32 %v280, 1.0
  %v282 = vrcp.pop %v281
  %v283 = vmul.f32 1.0, %v282
  %v284 = vtanh.pop %v277
  %v285 = vmul.f32 %v283, 0.0
  %287 = vrot.lane.b32.xlu0 %v284, 112
  %v288 = vpop.permute.xlu0 %287
  %v290 = vmul.f32 %v283, %v288
  %292 = vrot.lane.b32.xlu0 %v290, 8
  %v293 = vpop.permute.xlu0 %292
  %v295 = vadd.f32 %v285, %v293
  %v296 = vtanh.pop %v295
  %298 = vrot.lane.b32.xlu0 %v296, 16
  %v299 = vpop.permute.xlu0 %298
  %v301 = vmul.f32 %v283, %v299
  %303 = vrot.lane.b32.xlu0 %v301, 104
  %v304 = vpop.permute.xlu0 %303
  %vm306 = vcmask 60416
  %307 = vst.msk [vmem:[%s7] sm:$0xf] %vm306, %v304
  %s308 = scalar_lea.vmem [#allocation2], 4
  %v309 = vld [vmem:[%s308] sm:$0xf]
  %v310 = vsel %vm40, %v304, 0
  %312 = vmatprep.subr.mxu0 0.0
  %313 = vmatpush1.msra.mxu0 %v201
  %314 = vmatprep.subr.mxu0 0.0
  %315 = vmatpush1.msra.mxu0 0.0
  %316 = vmatprep.subr.mxu0 0.0
  %317 = vmatpush1.msra.mxu0 0.0
  %318 = vmatprep.subr.mxu0 0.0
  %319 = vmatpush1.msra.mxu0 0.0
  %320 = vmatprep.subr.mxu0 0.0
  %321 = vmatpush1.msra.mxu0 0.0
  %322 = vmatprep.subr.mxu0 0.0
  %323 = vmatpush1.msra.mxu0 0.0
  %324 = vmatprep.subr.mxu0 0.0
  %325 = vmatpush1.msra.mxu0 0.0
  %326 = vmatprep.subr.mxu0 0.0
  %327 = vmatpush1.msra.mxu0 0.0
  %328 = vmatprep.subr.mxu0 0.0
  %329 = vmatpush1.msra.mxu0 0.0
  %330 = vmatprep.subr.mxu0 0.0
  %331 = vmatpush1.msra.mxu0 0.0
  %332 = vmatprep.subr.mxu0 0.0
  %333 = vmatpush1.msra.mxu0 0.0
  %334 = vmatprep.subr.mxu0 0.0
  %335 = vmatpush1.msra.mxu0 0.0
  %336 = vmatprep.subr.mxu0 0.0
  %337 = vmatpush1.msra.mxu0 0.0
  %338 = vmatprep.subr.mxu0 0.0
  %339 = vmatpush1.msra.mxu0 0.0
  %340 = vmatprep.subr.mxu0 0.0
  %341 = vmatpush1.msra.mxu0 0.0
  %342 = vmatprep.subr.mxu0 0.0
  %343 = vmatpush1.msra.mxu0 0.0
  %344 = vmatprep.subr.mxu0 0.0
  %345 = vmatpush1.msra.mxu0 0.0
  %346 = vmatprep.subr.mxu0 0.0
  %347 = vmatpush1.msra.mxu0 0.0
  %348 = vmatprep.subr.mxu0 0.0
  %349 = vmatpush1.msra.mxu0 0.0
  %350 = vmatprep.subr.mxu0 0.0
  %351 = vmatpush1.msra.mxu0 0.0
  %352 = vmatprep.subr.mxu0 0.0
  %353 = vmatpush1.msra.mxu0 0.0
  %354 = vmatprep.subr.mxu0 0.0
  %355 = vmatpush1.msra.mxu0 0.0
  %356 = vmatprep.subr.mxu0 0.0
  %357 = vmatpush1.msra.mxu0 0.0
  %358 = vmatprep.subr.mxu0 0.0
  %359 = vmatpush1.msra.mxu0 0.0
  %360 = vmatprep.subr.mxu0 0.0
  %361 = vmatpush1.msra.mxu0 0.0
  %362 = vmatprep.subr.mxu0 0.0
  %363 = vmatpush1.msra.mxu0 0.0
  %364 = vmatprep.subr.mxu0 0.0
  %365 = vmatpush1.msra.mxu0 0.0
  %366 = vmatprep.subr.mxu0 0.0
  %367 = vmatpush1.msra.mxu0 0.0
  %368 = vmatprep.subr.mxu0 0.0
  %369 = vmatpush1.msra.mxu0 0.0
  %370 = vmatprep.subr.mxu0 0.0
  %371 = vmatpush1.msra.mxu0 0.0
  %372 = vmatprep.subr.mxu0 0.0
  %373 = vmatpush1.msra.mxu0 0.0
  %374 = vmatprep.subr.mxu0 0.0
  %375 = vmatpush1.msra.mxu0 0.0
  %376 = vmatprep.mubr.f32.mxu0 0.0
  %377 = vmatmul.mubr.f32.gmra.mrb[0].mxu0 %v310
  %v378 = vpop.f32.mrb[0].mxu0
  %v379 = vadd.f32 0.0, %v378
  %v380 = vpop.f32.mrb[0].mxu0
  %381 = vdwg.mxu0
  %v382 = vadd.f32 %v309, %v379
  %v383 = vxor.u32 %v382, 2147483648
  %v384 = vmul.f32 %v383, 1.442695
  %v385 = vpow.pop %v384
  %v386 = vadd.f32 %v385, 1.0
  %v387 = vrcp.pop %v386
  %v388 = vmul.f32 1.0, %v387
  %v389 = vtanh.pop %v382
  %v390 = vmul.f32 %v388, %v295
  %392 = vrot.lane.b32.xlu0 %v389, 112
  %v393 = vpop.permute.xlu0 %392
  %v395 = vmul.f32 %v388, %v393
  %397 = vrot.lane.b32.xlu0 %v395, 8
  %v398 = vpop.permute.xlu0 %397
  %v400 = vadd.f32 %v390, %v398
  %v401 = vtanh.pop %v400
  %403 = vrot.lane.b32.xlu0 %v401, 16
  %v404 = vpop.permute.xlu0 %403
  %v406 = vmul.f32 %v388, %v404
  %408 = vrot.lane.b32.xlu0 %v406, 104
  %v409 = vpop.permute.xlu0 %408
  %s411 = scalar_lea.vmem %s7, 4
  %412 = vst.msk [vmem:[%s411] sm:$0xf] %vm306, %v409
  %s413 = scalar_lea.vmem [#allocation3], 4
  %v414 = vld [vmem:[%s413] sm:$0xf]
  %415 = vmatprep.subr.mxu0 0.0
  %416 = vmatpush1.msra.mxu0 %v202
  %417 = vmatprep.subr.mxu0 0.0
  %418 = vmatpush1.msra.mxu0 0.0
  %419 = vmatprep.subr.mxu0 0.0
  %420 = vmatpush1.msra.mxu0 0.0
  %421 = vmatprep.subr.mxu0 0.0
  %422 = vmatpush1.msra.mxu0 0.0
  %423 = vmatprep.subr.mxu0 0.0
  %424 = vmatpush1.msra.mxu0 0.0
  %425 = vmatprep.subr.mxu0 0.0
  %426 = vmatpush1.msra.mxu0 0.0
  %427 = vmatprep.subr.mxu0 0.0
  %428 = vmatpush1.msra.mxu0 0.0
  %429 = vmatprep.subr.mxu0 0.0
  %430 = vmatpush1.msra.mxu0 0.0
  %431 = vmatprep.subr.mxu0 0.0
  %432 = vmatpush1.msra.mxu0 0.0
  %433 = vmatprep.subr.mxu0 0.0
  %434 = vmatpush1.msra.mxu0 0.0
  %435 = vmatprep.subr.mxu0 0.0
  %436 = vmatpush1.msra.mxu0 0.0
  %437 = vmatprep.subr.mxu0 0.0
  %438 = vmatpush1.msra.mxu0 0.0
  %439 = vmatprep.subr.mxu0 0.0
  %440 = vmatpush1.msra.mxu0 0.0
  %441 = vmatprep.subr.mxu0 0.0
  %442 = vmatpush1.msra.mxu0 0.0
  %443 = vmatprep.subr.mxu0 0.0
  %444 = vmatpush1.msra.mxu0 0.0
  %445 = vmatprep.subr.mxu0 0.0
  %446 = vmatpush1.msra.mxu0 0.0
  %447 = vmatprep.subr.mxu0 0.0
  %448 = vmatpush1.msra.mxu0 0.0
  %449 = vmatprep.subr.mxu0 0.0
  %450 = vmatpush1.msra.mxu0 0.0
  %451 = vmatprep.subr.mxu0 0.0
  %452 = vmatpush1.msra.mxu0 0.0
  %453 = vmatprep.subr.mxu0 0.0
  %454 = vmatpush1.msra.mxu0 0.0
  %455 = vmatprep.subr.mxu0 0.0
  %456 = vmatpush1.msra.mxu0 0.0
  %457 = vmatprep.subr.mxu0 0.0
  %458 = vmatpush1.msra.mxu0 0.0
  %459 = vmatprep.subr.mxu0 0.0
  %460 = vmatpush1.msra.mxu0 0.0
  %461 = vmatprep.subr.mxu0 0.0
  %462 = vmatpush1.msra.mxu0 0.0
  %463 = vmatprep.subr.mxu0 0.0
  %464 = vmatpush1.msra.mxu0 0.0
  %465 = vmatprep.subr.mxu0 0.0
  %466 = vmatpush1.msra.mxu0 0.0
  %467 = vmatprep.subr.mxu0 0.0
  %468 = vmatpush1.msra.mxu0 0.0
  %469 = vmatprep.subr.mxu0 0.0
  %470 = vmatpush1.msra.mxu0 0.0
  %471 = vmatprep.subr.mxu0 0.0
  %472 = vmatpush1.msra.mxu0 0.0
  %473 = vmatprep.subr.mxu0 0.0
  %474 = vmatpush1.msra.mxu0 0.0
  %475 = vmatprep.subr.mxu0 0.0
  %476 = vmatpush1.msra.mxu0 0.0
  %477 = vmatprep.subr.mxu0 0.0
  %478 = vmatpush1.msra.mxu0 0.0
  %479 = vmatprep.mubr.f32.mxu0 0.0
  %480 = vmatmul.mubr.f32.gmra.mrb[0].mxu0 %v205
  %v481 = vpop.f32.mrb[0].mxu0
  %v482 = vadd.f32 0.0, %v481
  %v483 = vpop.f32.mrb[0].mxu0
  %484 = vdwg.mxu0
  %v485 = vadd.f32 %v414, %v482
  %v486 = vxor.u32 %v485, 2147483648
  %v487 = vmul.f32 %v486, 1.442695
  %v488 = vpow.pop %v487
  %v489 = vadd.f32 %v488, 1.0
  %v490 = vrcp.pop %v489
  %v491 = vmul.f32 1.0, %v490
  %v492 = vtanh.pop %v485
  %v493 = vmul.f32 %v491, 0.0
  %495 = vrot.lane.b32.xlu0 %v492, 112
  %v496 = vpop.permute.xlu0 %495
  %v498 = vmul.f32 %v491, %v496
  %500 = vrot.lane.b32.xlu0 %v498, 8
  %v501 = vpop.permute.xlu0 %500
  %v503 = vadd.f32 %v493, %v501
  %v504 = vtanh.pop %v503
  %506 = vrot.lane.b32.xlu0 %v504, 16
  %v507 = vpop.permute.xlu0 %506
  %v509 = vmul.f32 %v491, %v507
  %511 = vrot.lane.b32.xlu0 %v509, 104
  %v512 = vpop.permute.xlu0 %511
  %s514 = scalar_lea.vmem [#allocation4], 4
  %515 = vst.msk [vmem:[%s514] sm:$0xf] %vm306, %v512
  %v516 = vld [vmem:[#allocation3] sm:$0xf]
  %v517 = vsel %vm40, %v512, 0
  %519 = vmatprep.subr.mxu0 0.0
  %520 = vmatpush1.msra.mxu0 %v202
  %521 = vmatprep.subr.mxu0 0.0
  %522 = vmatpush1.msra.mxu0 0.0
  %523 = vmatprep.subr.mxu0 0.0
  %524 = vmatpush1.msra.mxu0 0.0
  %525 = vmatprep.subr.mxu0 0.0
  %526 = vmatpush1.msra.mxu0 0.0
  %527 = vmatprep.subr.mxu0 0.0
  %528 = vmatpush1.msra.mxu0 0.0
  %529 = vmatprep.subr.mxu0 0.0
  %530 = vmatpush1.msra.mxu0 0.0
  %531 = vmatprep.subr.mxu0 0.0
  %532 = vmatpush1.msra.mxu0 0.0
  %533 = vmatprep.subr.mxu0 0.0
  %534 = vmatpush1.msra.mxu0 0.0
  %535 = vmatprep.subr.mxu0 0.0
  %536 = vmatpush1.msra.mxu0 0.0
  %537 = vmatprep.subr.mxu0 0.0
  %538 = vmatpush1.msra.mxu0 0.0
  %539 = vmatprep.subr.mxu0 0.0
  %540 = vmatpush1.msra.mxu0 0.0
  %541 = vmatprep.subr.mxu0 0.0
  %542 = vmatpush1.msra.mxu0 0.0
  %543 = vmatprep.subr.mxu0 0.0
  %544 = vmatpush1.msra.mxu0 0.0
  %545 = vmatprep.subr.mxu0 0.0
  %546 = vmatpush1.msra.mxu0 0.0
  %547 = vmatprep.subr.mxu0 0.0
  %548 = vmatpush1.msra.mxu0 0.0
  %549 = vmatprep.subr.mxu0 0.0
  %550 = vmatpush1.msra.mxu0 0.0
  %551 = vmatprep.subr.mxu0 0.0
  %552 = vmatpush1.msra.mxu0 0.0
  %553 = vmatprep.subr.mxu0 0.0
  %554 = vmatpush1.msra.mxu0 0.0
  %555 = vmatprep.subr.mxu0 0.0
  %556 = vmatpush1.msra.mxu0 0.0
  %557 = vmatprep.subr.mxu0 0.0
  %558 = vmatpush1.msra.mxu0 0.0
  %559 = vmatprep.subr.mxu0 0.0
  %560 = vmatpush1.msra.mxu0 0.0
  %561 = vmatprep.subr.mxu0 0.0
  %562 = vmatpush1.msra.mxu0 0.0
  %563 = vmatprep.subr.mxu0 0.0
  %564 = vmatpush1.msra.mxu0 0.0
  %565 = vmatprep.subr.mxu0 0.0
  %566 = vmatpush1.msra.mxu0 0.0
  %567 = vmatprep.subr.mxu0 0.0
  %568 = vmatpush1.msra.mxu0 0.0
  %569 = vmatprep.subr.mxu0 0.0
  %570 = vmatpush1.msra.mxu0 0.0
  %571 = vmatprep.subr.mxu0 0.0
  %572 = vmatpush1.msra.mxu0 0.0
  %573 = vmatprep.subr.mxu0 0.0
  %574 = vmatpush1.msra.mxu0 0.0
  %575 = vmatprep.subr.mxu0 0.0
  %576 = vmatpush1.msra.mxu0 0.0
  %577 = vmatprep.subr.mxu0 0.0
  %578 = vmatpush1.msra.mxu0 0.0
  %579 = vmatprep.subr.mxu0 0.0
  %580 = vmatpush1.msra.mxu0 0.0
  %581 = vmatprep.subr.mxu0 0.0
  %582 = vmatpush1.msra.mxu0 0.0
  %583 = vmatprep.mubr.f32.mxu0 0.0
  %584 = vmatmul.mubr.f32.gmra.mrb[0].mxu0 %v517
  %v585 = vpop.f32.mrb[0].mxu0
  %v586 = vadd.f32 0.0, %v585
  %v587 = vpop.f32.mrb[0].mxu0
  %588 = vdwg.mxu0
  %v589 = vadd.f32 %v516, %v586
  %v590 = vxor.u32 %v589, 2147483648
  %v591 = vmul.f32 %v590, 1.442695
  %v592 = vpow.pop %v591
  %v593 = vadd.f32 %v592, 1.0
  %v594 = vrcp.pop %v593
  %v595 = vmul.f32 1.0, %v594
  %v596 = vtanh.pop %v589
  %v597 = vmul.f32 %v595, %v503
  %599 = vrot.lane.b32.xlu0 %v596, 112
  %v600 = vpop.permute.xlu0 %599
  %v602 = vmul.f32 %v595, %v600
  %604 = vrot.lane.b32.xlu0 %v602, 8
  %v605 = vpop.permute.xlu0 %604
  %v607 = vadd.f32 %v597, %v605
  %v608 = vtanh.pop %v607
  %610 = vrot.lane.b32.xlu0 %v608, 16
  %v611 = vpop.permute.xlu0 %610
  %v613 = vmul.f32 %v595, %v611
  %615 = vrot.lane.b32.xlu0 %v613, 104
  %v616 = vpop.permute.xlu0 %615
  %618 = vst.msk [vmem:[#allocation4] sm:$0xf] %vm306, %v616
  %v619 = vld [vmem:[%s7] sm:$0xf]
  %v620 = vld [vmem:[%s7 + $0x4] sm:$0xf]
  %v621 = vld [vmem:[#allocation4] sm:$0xf]
  %v622 = vld [vmem:[#allocation4 + $0x4] sm:$0xf]
  %v623 = vadd.f32 %v619, %v621
  %v624 = vadd.f32 %v620, %v622
  %v625 = vmul.f32 %v623, 0.5
  %v626 = vmul.f32 %v624, 0.5
  %627 = vst.msk [vmem:[%s7] sm:$0xf] %vm306, %v625
  %628 = vst.msk [vmem:[%s7 + $0x4] sm:$0xf] %vm306, %v626
  // Predicated region
  $region30: #{tfilm_forward.2} parent=0 // pred_check
    _
  $region31: #{tfilm_forward.2} parent=0 // pred_check_branch
    %630 = sbr.rel (0) target = $region33
  $region32: #{tfilm_forward.2} parent=0 // pred_region
    _
  $region33: #{tfilm_forward.2} parent=0 // pred_fallthru
    _
  // Predicated region
  $region34: #{tfilm_forward.2} parent=0 // pred_check
    _
  $region35: #{tfilm_forward.2} parent=0 // pred_check_branch
    %632 = sbr.rel (0) target = $region37
  $region36: #{tfilm_forward.2} parent=0 // pred_region
    _
  $region37: #{tfilm_forward.2} parent=0 // pred_fallthru
    _

</llo_original>
